<compile_context>
chip_gen: v6e
topology: v6e:2x2x1
jax: 0.10.0
libtpu: 0.0.40
codegen_flags: <defaults>
</compile_context>

<pallas_src>
from functools import partial

import jax
import jax.numpy as jnp
from jax.experimental import pallas as pl
from jax.experimental.pallas import tpu as pltpu

_LN_EPS = 1e-5


# ------------------------------ small helpers --------------------------------

def _round_up(x, m):
    return ((x + m - 1) // m) * m


def _choose_row_tile(n_rows, row_bytes, *, vmem_budget=32 << 20, max_tile=512):
    """Row tile (multiple of 16 for the bf16 input): largest that keeps the
    double-buffered per-row working set inside a conservative VMEM budget,
    capped so big inputs still get >= 2 grid programs (v7x dual TensorCore)."""
    g = 16
    cap = max(g, (vmem_budget // (2 * max(row_bytes, 1))) // g * g)
    cap = min(cap, max_tile)
    if n_rows <= g:
        return g
    half = _round_up((n_rows + 1) // 2, g)
    return max(g, min(cap, half))


# ------------------------------- Pallas kernel -------------------------------

def _encoder_chain_kernel(x_ref, *refs, layouts):
    """Full encoder chain for one row tile; every tensor is 2-D and lane-dense.

    x_ref : [T, S0*d_model] (bf16); rows = (batch, ts_dim), cols = (segment, d)
    refs  : per-block constant weights (in `layouts` order), then the out ref.
    """
    out_ref = refs[-1]
    w = refs[:-1]
    x = x_ref[...].astype(jnp.float32)       # current-scale representation
    pred = None                               # running final_predict (f32)
    i = 0
    for kind, has_pad in layouts:
        if kind == "merge":
            if has_pad:
                # SegMerging replicate-pad as a 0/1 column-selection GEMM.
                x = jnp.dot(x, w[i][...], preferred_element_type=jnp.float32)
                i += 1
            avg = w[i][...]          # [K, K] block-diagonal per-group average
            gamma = w[i + 1][...]    # [1, K]
            beta = w[i + 2][...]     # [1, K]
            wm_blk = w[i + 3][...]   # [K, s_out*d]  kron(I, Wm)  (bf16)
            bm_t = w[i + 4][...]     # [1, s_out*d]
            i += 5
            # Exact two-pass LayerNorm over each win*d group, fully vectorised.
            mu = jnp.dot(x, avg, preferred_element_type=jnp.float32)
            xc = x - mu
            var = jnp.dot(xc * xc, avg, preferred_element_type=jnp.float32)
            xn = xc * jax.lax.rsqrt(var + _LN_EPS) * gamma + beta
            # Single merge GEMM -> next-scale representation [T, s_out*d].
            x = jnp.dot(xn.astype(jnp.bfloat16), wm_blk,
                        preferred_element_type=jnp.float32) + bm_t
        # Folded prediction head (linear_pred -> T -> linear_hid -> T) as one
        # GEMM with zero-padded, lane-dense output columns.
        w2 = w[i][...]               # [s*d, OLp]  (bf16)
        cst = w[i + 1][...]          # [1, OLp]
        i += 2
        contrib = jnp.dot(x.astype(jnp.bfloat16), w2,
                          preferred_element_type=jnp.float32) + cst
        pred = contrib if pred is None else pred + contrib
    out_ref[...] = pred.astype(out_ref.dtype)


# ---------------------------- parameter building -----------------------------

def init_linear(key, din, dout):
    """Deterministic Linear init (torch-default-style uniform), stored [din, dout]."""
    k1, k2 = jax.random.split(key)
    lim = 1.0 / (din ** 0.5)
    w = jax.random.uniform(k1, (din, dout), jnp.float32, -lim, lim)
    b = jax.random.uniform(k2, (dout,), jnp.float32, -lim, lim)
    return w, b


def _fold_pred_weights(wp, bp, wh, bh, seg_num, d_model, olp):
    """Fold linear_pred -> transpose -> linear_hid -> transpose into one GEMM.
    W2[(s,d),(o,l)] = Wh[s,o]*Wp[d,l];  const[(o,l)] = (sum_s Wh[s,o])*bp[l]+bh[o].
    Columns are zero-padded to `olp` (multiple of 128) to stay lane-dense."""
    ol = wh.shape[1] * wp.shape[1]
    w2 = jnp.einsum('so,dl->sdol', wh, wp).reshape(seg_num * d_model, ol)
    const = (wh.sum(0)[:, None] * bp[None, :] + bh[:, None]).reshape(1, ol)
    w2p = jnp.zeros((seg_num * d_model, olp), jnp.float32).at[:, :ol].set(w2)
    cp = jnp.zeros((1, olp), jnp.float32).at[:, :ol].set(const)
    return w2p.astype(jnp.bfloat16), cp


def init_encoder(key, *, e_blocks, win_size, d_model, gcn_dim, out_seg_num,
                 ts_dim, seg_len, in_seg_num):
    ol = out_seg_num * seg_len
    olp = _round_up(ol, 128)
    keys = iter(jax.random.split(key, 4 + 3 * e_blocks))

    params = {
        # Defined by the torch module but unused on the default forward path
        # (get_init_e with is_cold_sart=False and block_depth == 0):
        "fc": init_linear(next(keys), ts_dim, 16),
        "down1": init_linear(next(keys), d_model, 64),
        "down2": init_linear(next(keys), 64, 16),
        "init_cold": jnp.zeros((ts_dim, gcn_dim), jnp.float32),
        "chain": [],
    }
    layouts, gemm_kn, rsqrt_cols = [], 0, 0
    max_width = in_seg_num * d_model
    s_cur = in_seg_num
    for i in range(e_blocks):
        win = 1 if i == 0 else win_size
        if win > 1:
            s_in = s_cur
            pad = (-s_in) % win
            s_padded = s_in + pad
            s_out = s_padded // win
            wd = win * d_model
            kpad = s_padded * d_model          # == s_out * wd
            max_width = max(max_width, kpad, s_out * d_model)

            if pad:
                # Replicate the last `pad` segments (torch.cat(x, x[..,-pad:,..])).
                src = list(range(s_in * d_model)) + \
                      list(range((s_in - pad) * d_model, s_in * d_model))
                rep = jnp.zeros((s_in * d_model, kpad), jnp.float32)
                rep = rep.at[jnp.array(src), jnp.arange(kpad)].set(1.0)
                params["chain"].append(rep)
                gemm_kn += s_in * d_model * kpad

            avg = jnp.kron(jnp.eye(s_out, dtype=jnp.float32),
                           jnp.full((wd, wd), 1.0 / wd, jnp.float32))
            gamma = jnp.ones((1, kpad), jnp.float32)     # LayerNorm defaults,
            beta = jnp.zeros((1, kpad), jnp.float32)     # tiled over the groups
            wm, bm = init_linear(next(keys), wd, d_model)
            wm_blk = jnp.kron(jnp.eye(s_out, dtype=jnp.float32),
                              wm).astype(jnp.bfloat16)
            bm_t = jnp.tile(bm, s_out).reshape(1, s_out * d_model)
            params["chain"] += [avg, gamma, beta, wm_blk, bm_t]
            gemm_kn += 2 * kpad * kpad + kpad * s_out * d_model
            rsqrt_cols += kpad
            s_cur = s_out
            layouts.append(("merge", bool(pad)))
        else:
            layouts.append(("pred", False))

        wp, bp = init_linear(next(keys), d_model, seg_len)         # linear_pred
        wh, bh = init_linear(next(keys), s_cur, out_seg_num)       # linear_hid
        w2, cst = _fold_pred_weights(wp, bp, wh, bh, s_cur, d_model, olp)
        params["chain"] += [w2, cst]
        gemm_kn += s_cur * d_model * olp

    config = {
        "layouts": tuple(layouts),
        "out_len": ol,
        "out_len_padded": olp,
        "max_width": max_width,
        "gemm_kn": gemm_kn,
        "rsqrt_cols": rsqrt_cols,
    }
    return params, config


# -------------------------------- forward pass --------------------------------

def encoder_forward(params, x, config):
    """x: [B, ts_dim, seg_num, d_model] -> [B, out_seg_num*seg_len, ts_dim]."""
    B, n, S, d = x.shape
    BN = B * n
    ol, olp = config["out_len"], config["out_len_padded"]
    in_dim = S * d

    # (segment, d_model) flattening matches both the fused-merge grouping and
    # the kron-folded prediction weight ordering, so this reshape is free.
    # bf16 halves the dominant HBM read of a memory-bound kernel.
    x_flat = x.reshape(BN, in_dim).astype(jnp.bfloat16)

    weights = params["chain"]
    weight_bytes = sum(int(w.size) * w.dtype.itemsize for w in weights)
    # Per-row working set: bf16 x tile + f32 LN intermediates + padded pred.
    row_bytes = 2 * in_dim + 4 * (4 * config["max_width"] + 2 * olp)
    budget = max(4 << 20, (32 << 20) - 2 * weight_bytes)
    tile = _choose_row_tile(BN, row_bytes, vmem_budget=budget)
    bn_pad = _round_up(BN, tile)
    if bn_pad != BN:
        x_flat = jnp.pad(x_flat, ((0, bn_pad - BN), (0, 0)))
    grid = (bn_pad // tile,)

    in_specs = [pl.BlockSpec((tile, in_dim), lambda i: (i, 0))]
    in_specs += [pl.BlockSpec(w.shape, lambda i: (0, 0)) for w in weights]

    cost = pl.CostEstimate(
        flops=2 * bn_pad * config["gemm_kn"],
        transcendentals=bn_pad * config["rsqrt_cols"],
        bytes_accessed=2 * bn_pad * in_dim + 4 * bn_pad * olp + weight_bytes,
    )
    out = pl.pallas_call(
        partial(_encoder_chain_kernel, layouts=config["layouts"]),
        out_shape=jax.ShapeDtypeStruct((bn_pad, olp), jnp.float32),
        grid=grid,
        in_specs=in_specs,
        out_specs=pl.BlockSpec((tile, olp), lambda i: (i, 0)),
        compiler_params=pltpu.CompilerParams(
            dimension_semantics=("parallel",),
            vmem_limit_bytes=48 * 1024 * 1024),
        cost_estimate=cost,
    )(x_flat, *weights)

    # Rows are (b, n); columns are (out_seg, seg_len) flattened out_seg-major,
    # so the final rearrange 'b out_d s l -> b (s l) out_d' is slice+transpose.
    pred = out[:BN, :ol].reshape(B, n, ol)
    return pred.transpose(0, 2, 1)


# ------------------------------------ main ------------------------------------

if __name__ == "__main__":
    key = jax.random.PRNGKey(0)
    kx, kp = jax.random.split(key)

    # small, forward-consistent shapes
    B, ts_dim, in_seg_num, d_model = 2, 4, 8, 32
    e_blocks, win_size, out_seg_num, seg_len, gcn_dim = 2, 2, 4, 6, 16

    x = jax.random.normal(kx, (B, ts_dim, in_seg_num, d_model), jnp.float32)
    params, config = init_encoder(
        kp, e_blocks=e_blocks, win_size=win_size, d_model=d_model,
        gcn_dim=gcn_dim, out_seg_num=out_seg_num, ts_dim=ts_dim,
        seg_len=seg_len, in_seg_num=in_seg_num)

    fwd = jax.jit(lambda p, xi: encoder_forward(p, xi, config))
    out = fwd(params, x)
    jax.block_until_ready(out)

    assert out.shape == (B, out_seg_num * seg_len, ts_dim), out.shape
    assert bool(jnp.all(jnp.isfinite(out)))
    print("KERNEL_OK")
</pallas_src>

<mosaic_0001>
module attributes {stable_mosaic.version = 11 : i64} {
  func.func @_encoder_chain_kernel(%arg0: i32, %arg1: memref<16x256xbf16, #tpu.memory_space<vmem>>, %arg2: memref<256x128xbf16, #tpu.memory_space<vmem>>, %arg3: memref<1x128xf32, #tpu.memory_space<vmem>>, %arg4: memref<256x256xf32, #tpu.memory_space<vmem>>, %arg5: memref<1x256xf32, #tpu.memory_space<vmem>>, %arg6: memref<1x256xf32, #tpu.memory_space<vmem>>, %arg7: memref<256x128xbf16, #tpu.memory_space<vmem>>, %arg8: memref<1x128xf32, #tpu.memory_space<vmem>>, %arg9: memref<128x128xbf16, #tpu.memory_space<vmem>>, %arg10: memref<1x128xf32, #tpu.memory_space<vmem>>, %arg11: memref<16x128xf32, #tpu.memory_space<vmem>>) attributes {dimension_semantics = [#tpu.dimension_semantics<parallel>], iteration_bounds = array<i64: 1>, scalar_prefetch = 0 : i64, scratch_operands = 0 : i64, tpu.core_type = #tpu.core_type<tc>, window_params = [{transform_indices = @transform_0, window_bounds = array<i64: 16, 256>}, {pipeline_mode = #tpu.pipeline_mode<synchronous>, transform_indices = @transform_1, window_bounds = array<i64: 256, 128>}, {pipeline_mode = #tpu.pipeline_mode<synchronous>, transform_indices = @transform_2, window_bounds = array<i64: 1, 128>}, {pipeline_mode = #tpu.pipeline_mode<synchronous>, transform_indices = @transform_3, window_bounds = array<i64: 256, 256>}, {pipeline_mode = #tpu.pipeline_mode<synchronous>, transform_indices = @transform_4, window_bounds = array<i64: 1, 256>}, {pipeline_mode = #tpu.pipeline_mode<synchronous>, transform_indices = @transform_5, window_bounds = array<i64: 1, 256>}, {pipeline_mode = #tpu.pipeline_mode<synchronous>, transform_indices = @transform_6, window_bounds = array<i64: 256, 128>}, {pipeline_mode = #tpu.pipeline_mode<synchronous>, transform_indices = @transform_7, window_bounds = array<i64: 1, 128>}, {pipeline_mode = #tpu.pipeline_mode<synchronous>, transform_indices = @transform_8, window_bounds = array<i64: 128, 128>}, {pipeline_mode = #tpu.pipeline_mode<synchronous>, transform_indices = @transform_9, window_bounds = array<i64: 1, 128>}, {transform_indices = @transform_10, window_bounds = array<i64: 16, 128>}]} {
    %c0 = arith.constant 0 : index
    %c0_0 = arith.constant 0 : index
    %0 = vector.load %arg1[%c0, %c0_0] : memref<16x256xbf16, #tpu.memory_space<vmem>>, vector<16x256xbf16>
    %1 = arith.extf %0 : vector<16x256xbf16> to vector<16x256xf32>
    %c0_1 = arith.constant 0 : index
    %c0_2 = arith.constant 0 : index
    %2 = vector.load %arg2[%c0_1, %c0_2] : memref<256x128xbf16, #tpu.memory_space<vmem>>, vector<256x128xbf16>
    %c0_3 = arith.constant 0 : index
    %c0_4 = arith.constant 0 : index
    %3 = vector.load %arg3[%c0_3, %c0_4] : memref<1x128xf32, #tpu.memory_space<vmem>>, vector<1x128xf32>
    %4 = arith.truncf %1 : vector<16x256xf32> to vector<16x256xbf16>
    %cst = arith.constant dense<0.000000e+00> : vector<16x128xf32>
    %5 = tpu.matmul %4, %2, %cst {dimension_numbers = #tpu.dot_dimension_numbers<[1], [0], [0], [1], [0, 0, 1, 1], [], []>} : vector<16x256xbf16>, vector<256x128xbf16>, vector<16x128xf32> -> vector<16x128xf32>
    %6 = vector.broadcast %3 : vector<1x128xf32> to vector<16x128xf32>
    %7 = arith.addf %5, %6 : vector<16x128xf32>
    %c0_5 = arith.constant 0 : index
    %c0_6 = arith.constant 0 : index
    %8 = vector.load %arg4[%c0_5, %c0_6] : memref<256x256xf32, #tpu.memory_space<vmem>>, vector<256x256xf32>
    %c0_7 = arith.constant 0 : index
    %c0_8 = arith.constant 0 : index
    %9 = vector.load %arg5[%c0_7, %c0_8] : memref<1x256xf32, #tpu.memory_space<vmem>>, vector<1x256xf32>
    %c0_9 = arith.constant 0 : index
    %c0_10 = arith.constant 0 : index
    %10 = vector.load %arg6[%c0_9, %c0_10] : memref<1x256xf32, #tpu.memory_space<vmem>>, vector<1x256xf32>
    %c0_11 = arith.constant 0 : index
    %c0_12 = arith.constant 0 : index
    %11 = vector.load %arg7[%c0_11, %c0_12] : memref<256x128xbf16, #tpu.memory_space<vmem>>, vector<256x128xbf16>
    %c0_13 = arith.constant 0 : index
    %c0_14 = arith.constant 0 : index
    %12 = vector.load %arg8[%c0_13, %c0_14] : memref<1x128xf32, #tpu.memory_space<vmem>>, vector<1x128xf32>
    %cst_15 = arith.constant dense<0.000000e+00> : vector<16x256xf32>
    %13 = tpu.matmul %1, %8, %cst_15 {dimension_numbers = #tpu.dot_dimension_numbers<[1], [0], [0], [1], [0, 0, 1, 1], [], []>} : vector<16x256xf32>, vector<256x256xf32>, vector<16x256xf32> -> vector<16x256xf32>
    %14 = arith.subf %1, %13 : vector<16x256xf32>
    %15 = arith.mulf %14, %14 : vector<16x256xf32>
    %cst_16 = arith.constant dense<0.000000e+00> : vector<16x256xf32>
    %16 = tpu.matmul %15, %8, %cst_16 {dimension_numbers = #tpu.dot_dimension_numbers<[1], [0], [0], [1], [0, 0, 1, 1], [], []>} : vector<16x256xf32>, vector<256x256xf32>, vector<16x256xf32> -> vector<16x256xf32>
    %cst_17 = arith.constant 9.99999974E-6 : f32
    %17 = vector.broadcast %cst_17 : f32 to vector<16x256xf32>
    %18 = arith.addf %16, %17 : vector<16x256xf32>
    %19 = math.rsqrt %18 : vector<16x256xf32>
    %20 = arith.mulf %14, %19 : vector<16x256xf32>
    %21 = vector.broadcast %9 : vector<1x256xf32> to vector<16x256xf32>
    %22 = arith.mulf %20, %21 : vector<16x256xf32>
    %23 = vector.broadcast %10 : vector<1x256xf32> to vector<16x256xf32>
    %24 = arith.addf %22, %23 : vector<16x256xf32>
    %25 = arith.truncf %24 : vector<16x256xf32> to vector<16x256xbf16>
    %cst_18 = arith.constant dense<0.000000e+00> : vector<16x128xf32>
    %26 = tpu.matmul %25, %11, %cst_18 {dimension_numbers = #tpu.dot_dimension_numbers<[1], [0], [0], [1], [0, 0, 1, 1], [], []>} : vector<16x256xbf16>, vector<256x128xbf16>, vector<16x128xf32> -> vector<16x128xf32>
    %27 = vector.broadcast %12 : vector<1x128xf32> to vector<16x128xf32>
    %28 = arith.addf %26, %27 : vector<16x128xf32>
    %c0_19 = arith.constant 0 : index
    %c0_20 = arith.constant 0 : index
    %29 = vector.load %arg9[%c0_19, %c0_20] : memref<128x128xbf16, #tpu.memory_space<vmem>>, vector<128x128xbf16>
    %c0_21 = arith.constant 0 : index
    %c0_22 = arith.constant 0 : index
    %30 = vector.load %arg10[%c0_21, %c0_22] : memref<1x128xf32, #tpu.memory_space<vmem>>, vector<1x128xf32>
    %31 = arith.truncf %28 : vector<16x128xf32> to vector<16x128xbf16>
    %cst_23 = arith.constant dense<0.000000e+00> : vector<16x128xf32>
    %32 = tpu.matmul %31, %29, %cst_23 {dimension_numbers = #tpu.dot_dimension_numbers<[1], [0], [0], [1], [0, 0, 1, 1], [], []>} : vector<16x128xbf16>, vector<128x128xbf16>, vector<16x128xf32> -> vector<16x128xf32>
    %33 = vector.broadcast %30 : vector<1x128xf32> to vector<16x128xf32>
    %34 = arith.addf %32, %33 : vector<16x128xf32>
    %35 = arith.addf %7, %34 : vector<16x128xf32>
    %c0_24 = arith.constant 0 : index
    %c0_25 = arith.constant 0 : index
    %36 = vector.load %arg11[%c0_24, %c0_25] : memref<16x128xf32, #tpu.memory_space<vmem>>, vector<16x128xf32>
    tpu.vector_store %arg11[%c0_24, %c0_25], %35 {strides = array<i32>} : memref<16x128xf32, #tpu.memory_space<vmem>>, vector<16x128xf32>,
    return
  }
  func.func @transform_0(%arg0: i32) -> (i32, i32) {
    %c0_i32 = arith.constant 0 : i32
    %c0_i32_0 = arith.constant 0 : i32
    return %arg0, %c0_i32 : i32, i32
  }
  func.func @transform_1(%arg0: i32) -> (i32, i32) {
    %c0_i32 = arith.constant 0 : i32
    %c0_i32_0 = arith.constant 0 : i32
    %c0_i32_1 = arith.constant 0 : i32
    return %c0_i32, %c0_i32_0 : i32, i32
  }
  func.func @transform_2(%arg0: i32) -> (i32, i32) {
    %c0_i32 = arith.constant 0 : i32
    %c0_i32_0 = arith.constant 0 : i32
    %c0_i32_1 = arith.constant 0 : i32
    return %c0_i32, %c0_i32_0 : i32, i32
  }
  func.func @transform_3(%arg0: i32) -> (i32, i32) {
    %c0_i32 = arith.constant 0 : i32
    %c0_i32_0 = arith.constant 0 : i32
    %c0_i32_1 = arith.constant 0 : i32
    return %c0_i32, %c0_i32_0 : i32, i32
  }
  func.func @transform_4(%arg0: i32) -> (i32, i32) {
    %c0_i32 = arith.constant 0 : i32
    %c0_i32_0 = arith.constant 0 : i32
    %c0_i32_1 = arith.constant 0 : i32
    return %c0_i32, %c0_i32_0 : i32, i32
  }
  func.func @transform_5(%arg0: i32) -> (i32, i32) {
    %c0_i32 = arith.constant 0 : i32
    %c0_i32_0 = arith.constant 0 : i32
    %c0_i32_1 = arith.constant 0 : i32
    return %c0_i32, %c0_i32_0 : i32, i32
  }
  func.func @transform_6(%arg0: i32) -> (i32, i32) {
    %c0_i32 = arith.constant 0 : i32
    %c0_i32_0 = arith.constant 0 : i32
    %c0_i32_1 = arith.constant 0 : i32
    return %c0_i32, %c0_i32_0 : i32, i32
  }
  func.func @transform_7(%arg0: i32) -> (i32, i32) {
    %c0_i32 = arith.constant 0 : i32
    %c0_i32_0 = arith.constant 0 : i32
    %c0_i32_1 = arith.constant 0 : i32
    return %c0_i32, %c0_i32_0 : i32, i32
  }
  func.func @transform_8(%arg0: i32) -> (i32, i32) {
    %c0_i32 = arith.constant 0 : i32
    %c0_i32_0 = arith.constant 0 : i32
    %c0_i32_1 = arith.constant 0 : i32
    return %c0_i32, %c0_i32_0 : i32, i32
  }
  func.func @transform_9(%arg0: i32) -> (i32, i32) {
    %c0_i32 = arith.constant 0 : i32
    %c0_i32_0 = arith.constant 0 : i32
    %c0_i32_1 = arith.constant 0 : i32
    return %c0_i32, %c0_i32_0 : i32, i32
  }
  func.func @transform_10(%arg0: i32) -> (i32, i32) {
    %c0_i32 = arith.constant 0 : i32
    %c0_i32_0 = arith.constant 0 : i32
    return %arg0, %c0_i32 : i32, i32
  }
}

</mosaic_0001>

<llo_original>
// kernel: _lambda_.1
$region0: #{_lambda_.1}
  #allocation0 [shape = 'u32[]', space=smem, size = 0x4, offset = 0x4, fixed_abs, tag = 'smem constant byte address 0x4 - core index']
  #allocation1 [shape = 'u32[144,128]{1,0:T(1,128)}', space=vmem, size = 0x12000, scoped, tag = 'internal scratch']
  %s0 = inlined_call_operand.vmem [shape: bf16[16,256], index: 0, kind: input, shape index: {}]
  %s1 = inlined_call_operand.vmem [shape: bf16[256,128], index: 1, kind: input, shape index: {}]
  %s2 = inlined_call_operand.vmem [shape: f32[1,128], index: 2, kind: input, shape index: {}]
  %s3 = inlined_call_operand.hbm [shape: f32[256,256], index: 3, kind: input, shape index: {}]
  %s4 = inlined_call_operand.vmem [shape: f32[1,256], index: 4, kind: input, shape index: {}]
  %s5 = inlined_call_operand.vmem [shape: f32[1,256], index: 5, kind: input, shape index: {}]
  %s6 = inlined_call_operand.hbm [shape: bf16[256,128], index: 6, kind: input, shape index: {}]
  %s7 = inlined_call_operand.vmem [shape: f32[1,128], index: 7, kind: input, shape index: {}]
  %s8 = inlined_call_operand.hbm [shape: bf16[128,128], index: 8, kind: input, shape index: {}]
  %s9 = inlined_call_operand.vmem [shape: f32[1,128], index: 9, kind: input, shape index: {}]
  %s10 = inlined_call_operand.vmem [shape: f32[16,128], index: 10, kind: output, shape index: {}]
  %s11 = sld [smem:[#allocation0]]
  $region62: #{_lambda_.1} parent=0
    _
  %s13 = ssub.s32 1, %s11
  %s14 = scalar_select 0, %s13, %s11
  $region1: #{_lambda_.1} parent=0
    #allocation2 [shape = 'u8[262144]{0}', space=vmem, size = 0x40000, scoped, tag = 'input window, operand 3, single buffered']
    #allocation3 [shape = 's32[1]{0}', space=sflag, size = 0x4, scoped, tag = 'scoped memory for _lambda_.1']
    #allocation4 [shape = 'u8[65536]{0}', space=vmem, size = 0x10000, scoped, tag = 'input window, operand 6, single buffered']
    #allocation5 [shape = 's32[1]{0}', space=sflag, size = 0x4, scoped, tag = 'scoped memory for _lambda_.1']
    #allocation6 [shape = 'u8[32768]{0}', space=vmem, size = 0x8000, scoped, tag = 'input window, operand 8, single buffered']
    %15 = vsyncpa [#allocation3], 0
    %16 = vsyncpa [#allocation5], 0
    // Predicated region
    $region2: #{_lambda_.1} parent=1 // pred_check
      _
    $region3: #{_lambda_.1} parent=1 // pred_check_branch
      %18 = sbr.rel (0) target = $region5
    $region4: #{_lambda_.1} parent=1 // pred_region
      _
    $region5: #{_lambda_.1} parent=1 // pred_fallthru
      _
    // Predicated region
    $region6: #{_lambda_.1} parent=1 // pred_check
      _
    $region7: #{_lambda_.1} parent=1 // pred_check_branch
      %20 = sbr.rel (0) target = $region9
    $region8: #{_lambda_.1} parent=1 // pred_region
      _
    $region9: #{_lambda_.1} parent=1 // pred_fallthru
      _
    // Predicated region
    $region10: #{_lambda_.1} parent=1 // pred_check
      _
    $region11: #{_lambda_.1} parent=1 // pred_check_branch
      %22 = sbr.rel (0) target = $region13
    $region12: #{_lambda_.1} parent=1 // pred_region
      _
    $region13: #{_lambda_.1} parent=1 // pred_fallthru
      _
    // Predicated region
    $region14: #{_lambda_.1} parent=1 // pred_check
      _
    $region15: #{_lambda_.1} parent=1 // pred_check_branch
      %24 = sbr.rel (0) target = $region17
    $region16: #{_lambda_.1} parent=1 // pred_region
      %s26 = ssub.s32 8192, 8192
      %27 = vsyncadd [#allocation3], %s26
      %s28 = sshll.u32 [#allocation2], 4
      %s29 = int_to_ptr.vmem [resolvable:$true] %s28
      %34 = dma.hbm_to_vmem [thread:$0]  %s3, 8192, %s29, [#allocation3], 256, 256, 16
    $region17: #{_lambda_.1} parent=1 // pred_fallthru
      _
    // Predicated region
    $region18: #{_lambda_.1} parent=1 // pred_check
      _
    $region19: #{_lambda_.1} parent=1 // pred_check_branch
      %36 = sbr.rel (0) target = $region21
    $region20: #{_lambda_.1} parent=1 // pred_region
      _
    $region21: #{_lambda_.1} parent=1 // pred_fallthru
      _
    // Predicated region
    $region22: #{_lambda_.1} parent=1 // pred_check
      _
    $region23: #{_lambda_.1} parent=1 // pred_check_branch
      %38 = sbr.rel (0) target = $region25
    $region24: #{_lambda_.1} parent=1 // pred_region
      _
    $region25: #{_lambda_.1} parent=1 // pred_fallthru
      _
    // Predicated region
    $region26: #{_lambda_.1} parent=1 // pred_check
      _
    $region27: #{_lambda_.1} parent=1 // pred_check_branch
      %40 = sbr.rel (0) target = $region29
    $region28: #{_lambda_.1} parent=1 // pred_region
      %s42 = ssub.s32 2048, 2048
      %43 = vsyncadd [#allocation5], %s42
      %s44 = sshll.u32 [#allocation4], 4
      %s45 = int_to_ptr.vmem [resolvable:$true] %s44
      %50 = dma.hbm_to_vmem [thread:$0]  %s6, 2048, %s45, [#allocation5], 64, 64, 4
    $region29: #{_lambda_.1} parent=1 // pred_fallthru
      _
    // Predicated region
    $region30: #{_lambda_.1} parent=1 // pred_check
      _
    $region31: #{_lambda_.1} parent=1 // pred_check_branch
      %52 = sbr.rel (0) target = $region33
    $region32: #{_lambda_.1} parent=1 // pred_region
      _
    $region33: #{_lambda_.1} parent=1 // pred_fallthru
      _
    // Predicated region
    $region34: #{_lambda_.1} parent=1 // pred_check
      _
    $region35: #{_lambda_.1} parent=1 // pred_check_branch
      %54 = sbr.rel (0) target = $region37
    $region36: #{_lambda_.1} parent=1 // pred_region
      %s56 = ssub.s32 1024, 1024
      %57 = vsyncadd [#allocation5], %s56
      %s58 = sshll.u32 [#allocation6], 4
      %s59 = int_to_ptr.vmem [resolvable:$true] %s58
      %64 = dma.hbm_to_vmem [thread:$0]  %s8, 1024, %s59, [#allocation5], 64, 64, 4
    $region37: #{_lambda_.1} parent=1 // pred_fallthru
      _
    // Predicated region
    $region38: #{_lambda_.1} parent=1 // pred_check
      _
    $region39: #{_lambda_.1} parent=1 // pred_check_branch
      %66 = sbr.rel (0) target = $region41
    $region40: #{_lambda_.1} parent=1 // pred_region
      _
    $region41: #{_lambda_.1} parent=1 // pred_fallthru
      _
    // Predicated region
    $region42: #{_lambda_.1} parent=1 // pred_check
      _
    $region43: #{_lambda_.1} parent=1 // pred_check_branch
      %68 = sbr.rel (0) target = $region45
    $region44: #{_lambda_.1} parent=1 // pred_region
      %69 = dma.done [#allocation3], 8192
    $region45: #{_lambda_.1} parent=1 // pred_fallthru
      _
    // Predicated region
    $region46: #{_lambda_.1} parent=1 // pred_check
      _
    $region47: #{_lambda_.1} parent=1 // pred_check_branch
      %71 = sbr.rel (0) target = $region49
    $region48: #{_lambda_.1} parent=1 // pred_region
      %72 = dma.done [#allocation5], 2048
    $region49: #{_lambda_.1} parent=1 // pred_fallthru
      _
    // Predicated region
    $region50: #{_lambda_.1} parent=1 // pred_check
      _
    $region51: #{_lambda_.1} parent=1 // pred_check_branch
      %74 = sbr.rel (0) target = $region53
    $region52: #{_lambda_.1} parent=1 // pred_region
      %75 = dma.done [#allocation5], 1024
    $region53: #{_lambda_.1} parent=1 // pred_fallthru
      _
    %v77 = vld [vmem:[%s0] sm:$0xff]
    %v78 = vld [vmem:[%s0 + $0x8] sm:$0xff]
    %v79 = vunpack.c.l.bf16 %v77
    %v80 = vunpack.c.h.bf16 %v77
    %v81 = vunpack.c.l.bf16 %v78
    %v82 = vunpack.c.h.bf16 %v78
    %v83 = vld [vmem:[%s1] sm:$0xf]
    %v84 = vld [vmem:[%s1 + $0x4] sm:$0xf]
    %v85 = vld [vmem:[%s1 + $0x8] sm:$0xf]
    %v86 = vld [vmem:[%s1 + $0xc] sm:$0xf]
    %v87 = vld [vmem:[%s1 + $0x10] sm:$0xf]
    %v88 = vld [vmem:[%s1 + $0x14] sm:$0xf]
    %v89 = vld [vmem:[%s1 + $0x18] sm:$0xf]
    %v90 = vld [vmem:[%s1 + $0x1c] sm:$0xf]
    %v91 = vld [vmem:[%s1 + $0x20] sm:$0xf]
    %v92 = vld [vmem:[%s1 + $0x24] sm:$0xf]
    %v93 = vld [vmem:[%s1 + $0x28] sm:$0xf]
    %v94 = vld [vmem:[%s1 + $0x2c] sm:$0xf]
    %v95 = vld [vmem:[%s1 + $0x30] sm:$0xf]
    %v96 = vld [vmem:[%s1 + $0x34] sm:$0xf]
    %v97 = vld [vmem:[%s1 + $0x38] sm:$0xf]
    %v98 = vld [vmem:[%s1 + $0x3c] sm:$0xf]
    %v99 = vld [vmem:[%s1 + $0x40] sm:$0xf]
    %v100 = vld [vmem:[%s1 + $0x44] sm:$0xf]
    %v101 = vld [vmem:[%s1 + $0x48] sm:$0xf]
    %v102 = vld [vmem:[%s1 + $0x4c] sm:$0xf]
    %v103 = vld [vmem:[%s1 + $0x50] sm:$0xf]
    %v104 = vld [vmem:[%s1 + $0x54] sm:$0xf]
    %v105 = vld [vmem:[%s1 + $0x58] sm:$0xf]
    %v106 = vld [vmem:[%s1 + $0x5c] sm:$0xf]
    %v107 = vld [vmem:[%s1 + $0x60] sm:$0xf]
    %v108 = vld [vmem:[%s1 + $0x64] sm:$0xf]
    %v109 = vld [vmem:[%s1 + $0x68] sm:$0xf]
    %v110 = vld [vmem:[%s1 + $0x6c] sm:$0xf]
    %v111 = vld [vmem:[%s1 + $0x70] sm:$0xf]
    %v112 = vld [vmem:[%s1 + $0x74] sm:$0xf]
    %v113 = vld [vmem:[%s1 + $0x78] sm:$0xf]
    %v114 = vld [vmem:[%s1 + $0x7c] sm:$0xf]
    %v115 = vld [vmem:[%s2] sm:$0x1]
    %v117 = vlaneseq
    %v118 = vshrl.u32 %v117, 7
    %v119 = vsub.s32 0, %v118
    %v120 = vrot.slane %v115, %v119
    %v124 = vunpack.c.l.b16 %v77
    %v125 = vunpack.c.h.b16 %v77
    %v126 = vunpack.c.l.b16 %v78
    %v127 = vunpack.c.h.b16 %v78
    %v128 = vpack.c.b16 %v126, %v124
    %v129 = vpack.c.b16 %v127, %v125
    %v164 = vunpack.c.l.b16 %v83
    %v165 = vunpack.c.l.b16 %v84
    %v166 = vunpack.c.l.b16 %v85
    %v167 = vunpack.c.l.b16 %v86
    %v168 = vunpack.c.l.b16 %v87
    %v169 = vunpack.c.l.b16 %v88
    %v170 = vunpack.c.l.b16 %v89
    %v171 = vunpack.c.l.b16 %v90
    %v172 = vunpack.c.l.b16 %v91
    %v173 = vunpack.c.l.b16 %v92
    %v174 = vunpack.c.l.b16 %v93
    %v175 = vunpack.c.l.b16 %v94
    %v176 = vunpack.c.l.b16 %v95
    %v177 = vunpack.c.l.b16 %v96
    %v178 = vunpack.c.l.b16 %v97
    %v179 = vunpack.c.l.b16 %v98
    %v180 = vunpack.c.l.b16 %v99
    %v181 = vunpack.c.l.b16 %v100
    %v182 = vunpack.c.l.b16 %v101
    %v183 = vunpack.c.l.b16 %v102
    %v184 = vunpack.c.l.b16 %v103
    %v185 = vunpack.c.l.b16 %v104
    %v186 = vunpack.c.l.b16 %v105
    %v187 = vunpack.c.l.b16 %v106
    %v188 = vunpack.c.l.b16 %v107
    %v189 = vunpack.c.l.b16 %v108
    %v190 = vunpack.c.l.b16 %v109
    %v191 = vunpack.c.l.b16 %v110
    %v192 = vunpack.c.l.b16 %v111
    %v193 = vunpack.c.l.b16 %v112
    %v194 = vunpack.c.l.b16 %v113
    %v195 = vunpack.c.l.b16 %v114
    %v196 = vpack.c.b16 %v165, %v164
    %v197 = vpack.c.b16 %v167, %v166
    %v198 = vpack.c.b16 %v169, %v168
    %v199 = vpack.c.b16 %v171, %v170
    %v200 = vpack.c.b16 %v173, %v172
    %v201 = vpack.c.b16 %v175, %v174
    %v202 = vpack.c.b16 %v177, %v176
    %v203 = vpack.c.b16 %v179, %v178
    %v204 = vpack.c.b16 %v181, %v180
    %v205 = vpack.c.b16 %v183, %v182
    %v206 = vpack.c.b16 %v185, %v184
    %v207 = vpack.c.b16 %v187, %v186
    %v208 = vpack.c.b16 %v189, %v188
    %v209 = vpack.c.b16 %v191, %v190
    %v210 = vpack.c.b16 %v193, %v192
    %v211 = vpack.c.b16 %v195, %v194
    %228 = vmatprep.subr.bf16.mxu0 0
    %229 = vmatpush1.bf16.msra.mxu0 %v203
    %230 = vmatprep.subr.bf16.mxu0 0
    %231 = vmatpush1.bf16.msra.mxu0 %v202
    %232 = vmatprep.subr.bf16.mxu0 0
    %233 = vmatpush1.bf16.msra.mxu0 %v201
    %234 = vmatprep.subr.bf16.mxu0 0
    %235 = vmatpush1.bf16.msra.mxu0 %v200
    %236 = vmatprep.subr.bf16.mxu0 0
    %237 = vmatpush1.bf16.msra.mxu0 %v199
    %238 = vmatprep.subr.bf16.mxu0 0
    %239 = vmatpush1.bf16.msra.mxu0 %v198
    %240 = vmatprep.subr.bf16.mxu0 0
    %241 = vmatpush1.bf16.msra.mxu0 %v197
    %242 = vmatprep.subr.bf16.mxu0 0
    %243 = vmatpush1.bf16.msra.mxu0 %v196
    %244 = vmatprep.subr.bf16.mxu0 0
    %245 = vmatpush2.bf16.msra.mxu0 %v211
    %246 = vmatprep.subr.bf16.mxu0 0
    %247 = vmatpush2.bf16.msra.mxu0 %v210
    %248 = vmatprep.subr.bf16.mxu0 0
    %249 = vmatpush2.bf16.msra.mxu0 %v209
    %250 = vmatprep.subr.bf16.mxu0 0
    %251 = vmatpush2.bf16.msra.mxu0 %v208
    %252 = vmatprep.subr.bf16.mxu0 0
    %253 = vmatpush2.bf16.msra.mxu0 %v207
    %254 = vmatprep.subr.bf16.mxu0 0
    %255 = vmatpush2.bf16.msra.mxu0 %v206
    %256 = vmatprep.subr.bf16.mxu0 0
    %257 = vmatpush2.bf16.msra.mxu0 %v205
    %258 = vmatprep.subr.bf16.mxu0 0
    %259 = vmatpush2.bf16.msra.mxu0 %v204
    %260 = vmatprep.mubr.bf16.mxu0 %v129
    %261 = vmatmul.mubr.bf16.gmra.mxu0 %v128
    %v262 = vpop.f32.mrf.mxu0
    %v263 = vadd.f32 %v120, %v262
    %v264 = vpop.f32.mrf.mxu0
    %v265 = vpop.f32.mrf.mxu0
    %v266 = vadd.f32 %v120, %v265
    %v267 = vpop.f32.mrf.mxu0
    %268 = vdwg.mxu0
    %v269 = vld [vmem:[#allocation2] sm:$0xff]
    %v270 = vld [vmem:[#allocation2 + $0x8] sm:$0xff]
    %v271 = vld [vmem:[#allocation2 + $0x10] sm:$0xff]
    %v272 = vld [vmem:[#allocation2 + $0x18] sm:$0xff]
    %v273 = vld [vmem:[#allocation2 + $0x20] sm:$0xff]
    %v274 = vld [vmem:[#allocation2 + $0x28] sm:$0xff]
    %v275 = vld [vmem:[#allocation2 + $0x30] sm:$0xff]
    %v276 = vld [vmem:[#allocation2 + $0x38] sm:$0xff]
    %v277 = vld [vmem:[#allocation2 + $0x40] sm:$0xff]
    %v278 = vld [vmem:[#allocation2 + $0x48] sm:$0xff]
    %v279 = vld [vmem:[#allocation2 + $0x50] sm:$0xff]
    %v280 = vld [vmem:[#allocation2 + $0x58] sm:$0xff]
    %v281 = vld [vmem:[#allocation2 + $0x60] sm:$0xff]
    %v282 = vld [vmem:[#allocation2 + $0x68] sm:$0xff]
    %v283 = vld [vmem:[#allocation2 + $0x70] sm:$0xff]
    %v284 = vld [vmem:[#allocation2 + $0x78] sm:$0xff]
    %v285 = vld [vmem:[#allocation2 + $0x80] sm:$0xff]
    %v286 = vld [vmem:[#allocation2 + $0x88] sm:$0xff]
    %v287 = vld [vmem:[#allocation2 + $0x90] sm:$0xff]
    %v288 = vld [vmem:[#allocation2 + $0x98] sm:$0xff]
    %v289 = vld [vmem:[#allocation2 + $0xa0] sm:$0xff]
    %v290 = vld [vmem:[#allocation2 + $0xa8] sm:$0xff]
    %v291 = vld [vmem:[#allocation2 + $0xb0] sm:$0xff]
    %v292 = vld [vmem:[#allocation2 + $0xb8] sm:$0xff]
    %v293 = vld [vmem:[#allocation2 + $0xc0] sm:$0xff]
    %v294 = vld [vmem:[#allocation2 + $0xc8] sm:$0xff]
    %v295 = vld [vmem:[#allocation2 + $0xd0] sm:$0xff]
    %v296 = vld [vmem:[#allocation2 + $0xd8] sm:$0xff]
    %v297 = vld [vmem:[#allocation2 + $0xe0] sm:$0xff]
    %v298 = vld [vmem:[#allocation2 + $0xe8] sm:$0xff]
    %v299 = vld [vmem:[#allocation2 + $0xf0] sm:$0xff]
    %v300 = vld [vmem:[#allocation2 + $0xf8] sm:$0xff]
    %v301 = vld [vmem:[#allocation2 + $0x100] sm:$0xff]
    %v302 = vld [vmem:[#allocation2 + $0x108] sm:$0xff]
    %v303 = vld [vmem:[#allocation2 + $0x110] sm:$0xff]
    %v304 = vld [vmem:[#allocation2 + $0x118] sm:$0xff]
    %v305 = vld [vmem:[#allocation2 + $0x120] sm:$0xff]
    %v306 = vld [vmem:[#allocation2 + $0x128] sm:$0xff]
    %v307 = vld [vmem:[#allocation2 + $0x130] sm:$0xff]
    %v308 = vld [vmem:[#allocation2 + $0x138] sm:$0xff]
    %v309 = vld [vmem:[#allocation2 + $0x140] sm:$0xff]
    %v310 = vld [vmem:[#allocation2 + $0x148] sm:$0xff]
    %v311 = vld [vmem:[#allocation2 + $0x150] sm:$0xff]
    %v312 = vld [vmem:[#allocation2 + $0x158] sm:$0xff]
    %v313 = vld [vmem:[#allocation2 + $0x160] sm:$0xff]
    %v314 = vld [vmem:[#allocation2 + $0x168] sm:$0xff]
    %v315 = vld [vmem:[#allocation2 + $0x170] sm:$0xff]
    %v316 = vld [vmem:[#allocation2 + $0x178] sm:$0xff]
    %v317 = vld [vmem:[#allocation2 + $0x180] sm:$0xff]
    %v318 = vld [vmem:[#allocation2 + $0x188] sm:$0xff]
    %v319 = vld [vmem:[#allocation2 + $0x190] sm:$0xff]
    %v320 = vld [vmem:[#allocation2 + $0x198] sm:$0xff]
    %v321 = vld [vmem:[#allocation2 + $0x1a0] sm:$0xff]
    %v322 = vld [vmem:[#allocation2 + $0x1a8] sm:$0xff]
    %v323 = vld [vmem:[#allocation2 + $0x1b0] sm:$0xff]
    %v324 = vld [vmem:[#allocation2 + $0x1b8] sm:$0xff]
    %v325 = vld [vmem:[#allocation2 + $0x1c0] sm:$0xff]
    %v326 = vld [vmem:[#allocation2 + $0x1c8] sm:$0xff]
    %v327 = vld [vmem:[#allocation2 + $0x1d0] sm:$0xff]
    %v328 = vld [vmem:[#allocation2 + $0x1d8] sm:$0xff]
    %v329 = vld [vmem:[#allocation2 + $0x1e0] sm:$0xff]
    %v330 = vld [vmem:[#allocation2 + $0x1e8] sm:$0xff]
    %v331 = vld [vmem:[#allocation2 + $0x1f0] sm:$0xff]
    %v332 = vld [vmem:[#allocation2 + $0x1f8] sm:$0xff]
    %v333 = vld [vmem:[%s4] sm:$0x3]
    %v334 = vld [vmem:[%s5] sm:$0x3]
    %v335 = vld [vmem:[#allocation4] sm:$0xf]
    %v336 = vld [vmem:[#allocation4 + $0x4] sm:$0xf]
    %v337 = vld [vmem:[#allocation4 + $0x8] sm:$0xf]
    %v338 = vld [vmem:[#allocation4 + $0xc] sm:$0xf]
    %v339 = vld [vmem:[#allocation4 + $0x10] sm:$0xf]
    %v340 = vld [vmem:[#allocation4 + $0x14] sm:$0xf]
    %v341 = vld [vmem:[#allocation4 + $0x18] sm:$0xf]
    %v342 = vld [vmem:[#allocation4 + $0x1c] sm:$0xf]
    %v343 = vld [vmem:[#allocation4 + $0x20] sm:$0xf]
    %v344 = vld [vmem:[#allocation4 + $0x24] sm:$0xf]
    %v345 = vld [vmem:[#allocation4 + $0x28] sm:$0xf]
    %v346 = vld [vmem:[#allocation4 + $0x2c] sm:$0xf]
    %v347 = vld [vmem:[#allocation4 + $0x30] sm:$0xf]
    %v348 = vld [vmem:[#allocation4 + $0x34] sm:$0xf]
    %v349 = vld [vmem:[#allocation4 + $0x38] sm:$0xf]
    %v350 = vld [vmem:[#allocation4 + $0x3c] sm:$0xf]
    %v351 = vld [vmem:[#allocation4 + $0x40] sm:$0xf]
    %v352 = vld [vmem:[#allocation4 + $0x44] sm:$0xf]
    %v353 = vld [vmem:[#allocation4 + $0x48] sm:$0xf]
    %v354 = vld [vmem:[#allocation4 + $0x4c] sm:$0xf]
    %v355 = vld [vmem:[#allocation4 + $0x50] sm:$0xf]
    %v356 = vld [vmem:[#allocation4 + $0x54] sm:$0xf]
    %v357 = vld [vmem:[#allocation4 + $0x58] sm:$0xf]
    %v358 = vld [vmem:[#allocation4 + $0x5c] sm:$0xf]
    %v359 = vld [vmem:[#allocation4 + $0x60] sm:$0xf]
    %v360 = vld [vmem:[#allocation4 + $0x64] sm:$0xf]
    %v361 = vld [vmem:[#allocation4 + $0x68] sm:$0xf]
    %v362 = vld [vmem:[#allocation4 + $0x6c] sm:$0xf]
    %v363 = vld [vmem:[#allocation4 + $0x70] sm:$0xf]
    %v364 = vld [vmem:[#allocation4 + $0x74] sm:$0xf]
    %v365 = vld [vmem:[#allocation4 + $0x78] sm:$0xf]
    %v366 = vld [vmem:[#allocation4 + $0x7c] sm:$0xf]
    %v367 = vld [vmem:[%s7] sm:$0x1]
    %368 = vmatprep.subr.mxu0 %v300
    %369 = vmatpush1.msra.mxu0 %v299
    %370 = vmatprep.subr.mxu0 %v298
    %371 = vmatpush1.msra.mxu0 %v297
    %372 = vmatprep.subr.mxu0 %v296
    %373 = vmatpush1.msra.mxu0 %v295
    %374 = vmatprep.subr.mxu0 %v294
    %375 = vmatpush1.msra.mxu0 %v293
    %376 = vmatprep.subr.mxu0 %v292
    %377 = vmatpush1.msra.mxu0 %v291
    %378 = vmatprep.subr.mxu0 %v290
    %379 = vmatpush1.msra.mxu0 %v289
    %380 = vmatprep.subr.mxu0 %v288
    %381 = vmatpush1.msra.mxu0 %v287
    %382 = vmatprep.subr.mxu0 %v286
    %383 = vmatpush1.msra.mxu0 %v285
    %384 = vmatprep.subr.mxu0 %v284
    %385 = vmatpush1.msra.mxu0 %v283
    %386 = vmatprep.subr.mxu0 %v282
    %387 = vmatpush1.msra.mxu0 %v281
    %388 = vmatprep.subr.mxu0 %v280
    %389 = vmatpush1.msra.mxu0 %v279
    %390 = vmatprep.subr.mxu0 %v278
    %391 = vmatpush1.msra.mxu0 %v277
    %392 = vmatprep.subr.mxu0 %v276
    %393 = vmatpush1.msra.mxu0 %v275
    %394 = vmatprep.subr.mxu0 %v274
    %395 = vmatpush1.msra.mxu0 %v273
    %396 = vmatprep.subr.mxu0 %v272
    %397 = vmatpush1.msra.mxu0 %v271
    %398 = vmatprep.subr.mxu0 %v270
    %399 = vmatpush1.msra.mxu0 %v269
    %400 = vmatprep.subr.mxu0 %v332
    %401 = vmatpush2.msra.mxu0 %v331
    %402 = vmatprep.subr.mxu0 %v330
    %403 = vmatpush2.msra.mxu0 %v329
    %404 = vmatprep.subr.mxu0 %v328
    %405 = vmatpush2.msra.mxu0 %v327
    %406 = vmatprep.subr.mxu0 %v326
    %407 = vmatpush2.msra.mxu0 %v325
    %408 = vmatprep.subr.mxu0 %v324
    %409 = vmatpush2.msra.mxu0 %v323
    %410 = vmatprep.subr.mxu0 %v322
    %411 = vmatpush2.msra.mxu0 %v321
    %412 = vmatprep.subr.mxu0 %v320
    %413 = vmatpush2.msra.mxu0 %v319
    %414 = vmatprep.subr.mxu0 %v318
    %415 = vmatpush2.msra.mxu0 %v317
    %416 = vmatprep.subr.mxu0 %v316
    %417 = vmatpush2.msra.mxu0 %v315
    %418 = vmatprep.subr.mxu0 %v314
    %419 = vmatpush2.msra.mxu0 %v313
    %420 = vmatprep.subr.mxu0 %v312
    %421 = vmatpush2.msra.mxu0 %v311
    %422 = vmatprep.subr.mxu0 %v310
    %423 = vmatpush2.msra.mxu0 %v309
    %424 = vmatprep.subr.mxu0 %v308
    %425 = vmatpush2.msra.mxu0 %v307
    %426 = vmatprep.subr.mxu0 %v306
    %427 = vmatpush2.msra.mxu0 %v305
    %428 = vmatprep.subr.mxu0 %v304
    %429 = vmatpush2.msra.mxu0 %v303
    %430 = vmatprep.subr.mxu0 %v302
    %431 = vmatpush2.msra.mxu0 %v301
    %432 = vmatprep.mubr.f32.mxu0 %v80
    %433 = vmatmul.mubr.f32.gmra.mxu0 %v79
    %v434 = vpop.f32.mrf.mxu0
    %v435 = vadd.f32 0.0, %v434
    %v436 = vpop.f32.mrf.mxu0
    %v437 = vadd.f32 0.0, %v436
    %438 = vmatprep.mubr.f32.mxu0 %v82
    %439 = vmatmul.mubr.f32.gmra.mxu0 %v81
    %v440 = vpop.f32.mrf.mxu0
    %v441 = vadd.f32 0.0, %v440
    %v442 = vpop.f32.mrf.mxu0
    %v443 = vadd.f32 0.0, %v442
    %444 = vdwg.mxu0
    %v445 = vsub.f32 %v79, %v435
    %v446 = vsub.f32 %v80, %v437
    %v447 = vsub.f32 %v81, %v441
    %v448 = vsub.f32 %v82, %v443
    %v449 = vmul.f32 %v445, %v445
    %v450 = vmul.f32 %v446, %v446
    %v451 = vmul.f32 %v447, %v447
    %v452 = vmul.f32 %v448, %v448
    %453 = vmatprep.subr.mxu0 %v300
    %454 = vmatpush1.msra.mxu0 %v299
    %455 = vmatprep.subr.mxu0 %v298
    %456 = vmatpush1.msra.mxu0 %v297
    %457 = vmatprep.subr.mxu0 %v296
    %458 = vmatpush1.msra.mxu0 %v295
    %459 = vmatprep.subr.mxu0 %v294
    %460 = vmatpush1.msra.mxu0 %v293
    %461 = vmatprep.subr.mxu0 %v292
    %462 = vmatpush1.msra.mxu0 %v291
    %463 = vmatprep.subr.mxu0 %v290
    %464 = vmatpush1.msra.mxu0 %v289
    %465 = vmatprep.subr.mxu0 %v288
    %466 = vmatpush1.msra.mxu0 %v287
    %467 = vmatprep.subr.mxu0 %v286
    %468 = vmatpush1.msra.mxu0 %v285
    %469 = vmatprep.subr.mxu0 %v284
    %470 = vmatpush1.msra.mxu0 %v283
    %471 = vmatprep.subr.mxu0 %v282
    %472 = vmatpush1.msra.mxu0 %v281
    %473 = vmatprep.subr.mxu0 %v280
    %474 = vmatpush1.msra.mxu0 %v279
    %475 = vmatprep.subr.mxu0 %v278
    %476 = vmatpush1.msra.mxu0 %v277
    %477 = vmatprep.subr.mxu0 %v276
    %478 = vmatpush1.msra.mxu0 %v275
    %479 = vmatprep.subr.mxu0 %v274
    %480 = vmatpush1.msra.mxu0 %v273
    %481 = vmatprep.subr.mxu0 %v272
    %482 = vmatpush1.msra.mxu0 %v271
    %483 = vmatprep.subr.mxu0 %v270
    %484 = vmatpush1.msra.mxu0 %v269
    %485 = vmatprep.subr.mxu0 %v332
    %486 = vmatpush2.msra.mxu0 %v331
    %487 = vmatprep.subr.mxu0 %v330
    %488 = vmatpush2.msra.mxu0 %v329
    %489 = vmatprep.subr.mxu0 %v328
    %490 = vmatpush2.msra.mxu0 %v327
    %491 = vmatprep.subr.mxu0 %v326
    %492 = vmatpush2.msra.mxu0 %v325
    %493 = vmatprep.subr.mxu0 %v324
    %494 = vmatpush2.msra.mxu0 %v323
    %495 = vmatprep.subr.mxu0 %v322
    %496 = vmatpush2.msra.mxu0 %v321
    %497 = vmatprep.subr.mxu0 %v320
    %498 = vmatpush2.msra.mxu0 %v319
    %499 = vmatprep.subr.mxu0 %v318
    %500 = vmatpush2.msra.mxu0 %v317
    %501 = vmatprep.subr.mxu0 %v316
    %502 = vmatpush2.msra.mxu0 %v315
    %503 = vmatprep.subr.mxu0 %v314
    %504 = vmatpush2.msra.mxu0 %v313
    %505 = vmatprep.subr.mxu0 %v312
    %506 = vmatpush2.msra.mxu0 %v311
    %507 = vmatprep.subr.mxu0 %v310
    %508 = vmatpush2.msra.mxu0 %v309
    %509 = vmatprep.subr.mxu0 %v308
    %510 = vmatpush2.msra.mxu0 %v307
    %511 = vmatprep.subr.mxu0 %v306
    %512 = vmatpush2.msra.mxu0 %v305
    %513 = vmatprep.subr.mxu0 %v304
    %514 = vmatpush2.msra.mxu0 %v303
    %515 = vmatprep.subr.mxu0 %v302
    %516 = vmatpush2.msra.mxu0 %v301
    %517 = vmatprep.mubr.f32.mxu0 %v450
    %518 = vmatmul.mubr.f32.gmra.mxu0 %v449
    %v519 = vpop.f32.mrf.mxu0
    %v520 = vadd.f32 1e-05, %v519
    %v521 = vpop.f32.mrf.mxu0
    %v522 = vadd.f32 1e-05, %v521
    %523 = vmatprep.mubr.f32.mxu0 %v452
    %524 = vmatmul.mubr.f32.gmra.mxu0 %v451
    %v525 = vpop.f32.mrf.mxu0
    %v526 = vadd.f32 1e-05, %v525
    %v527 = vpop.f32.mrf.mxu0
    %v528 = vadd.f32 1e-05, %v527
    %529 = vdwg.mxu0
    %v530 = vrsqrt.pop %v520
    %v531 = vrsqrt.pop %v522
    %v532 = vrsqrt.pop %v526
    %v533 = vrsqrt.pop %v528
    %v534 = vmul.f32 %v445, %v530
    %v535 = vmul.f32 %v446, %v531
    %v536 = vmul.f32 %v447, %v532
    %v537 = vmul.f32 %v448, %v533
    %v539 = vlaneseq
    %v540 = vshrl.u32 %v539, 7
    %v541 = vsub.s32 0, %v540
    %v542 = vrot.slane %v333, %v541
    %v543 = vlaneseq
    %v544 = vshrl.u32 %v543, 7
    %v545 = vsub.s32 1, %v544
    %v546 = vrot.slane %v333, %v545
    %v549 = vmul.f32 %v534, %v542
    %v550 = vmul.f32 %v535, %v546
    %v551 = vmul.f32 %v536, %v542
    %v552 = vmul.f32 %v537, %v546
    %v554 = vlaneseq
    %v555 = vshrl.u32 %v554, 7
    %v556 = vsub.s32 0, %v555
    %v557 = vrot.slane %v334, %v556
    %v558 = vlaneseq
    %v559 = vshrl.u32 %v558, 7
    %v560 = vsub.s32 1, %v559
    %v561 = vrot.slane %v334, %v560
    %v564 = vadd.f32 %v549, %v557
    %v565 = vadd.f32 %v550, %v561
    %v566 = vadd.f32 %v551, %v557
    %v567 = vadd.f32 %v552, %v561
    %v568 = vpack.c.bf16 %v566, %v564
    %v569 = vpack.c.bf16 %v567, %v565
    %v571 = vlaneseq
    %v572 = vshrl.u32 %v571, 7
    %v573 = vsub.s32 0, %v572
    %v574 = vrot.slane %v367, %v573
    %v608 = vunpack.c.l.b16 %v335
    %v609 = vunpack.c.l.b16 %v336
    %v610 = vunpack.c.l.b16 %v337
    %v611 = vunpack.c.l.b16 %v338
    %v612 = vunpack.c.l.b16 %v339
    %v613 = vunpack.c.l.b16 %v340
    %v614 = vunpack.c.l.b16 %v341
    %v615 = vunpack.c.l.b16 %v342
    %v616 = vunpack.c.l.b16 %v343
    %v617 = vunpack.c.l.b16 %v344
    %v618 = vunpack.c.l.b16 %v345
    %v619 = vunpack.c.l.b16 %v346
    %v620 = vunpack.c.l.b16 %v347
    %v621 = vunpack.c.l.b16 %v348
    %v622 = vunpack.c.l.b16 %v349
    %v623 = vunpack.c.l.b16 %v350
    %v624 = vunpack.c.l.b16 %v351
    %v625 = vunpack.c.l.b16 %v352
    %v626 = vunpack.c.l.b16 %v353
    %v627 = vunpack.c.l.b16 %v354
    %v628 = vunpack.c.l.b16 %v355
    %v629 = vunpack.c.l.b16 %v356
    %v630 = vunpack.c.l.b16 %v357
    %v631 = vunpack.c.l.b16 %v358
    %v632 = vunpack.c.l.b16 %v359
    %v633 = vunpack.c.l.b16 %v360
    %v634 = vunpack.c.l.b16 %v361
    %v635 = vunpack.c.l.b16 %v362
    %v636 = vunpack.c.l.b16 %v363
    %v637 = vunpack.c.l.b16 %v364
    %v638 = vunpack.c.l.b16 %v365
    %v639 = vunpack.c.l.b16 %v366
    %v640 = vpack.c.b16 %v609, %v608
    %v641 = vpack.c.b16 %v611, %v610
    %v642 = vpack.c.b16 %v613, %v612
    %v643 = vpack.c.b16 %v615, %v614
    %v644 = vpack.c.b16 %v617, %v616
    %v645 = vpack.c.b16 %v619, %v618
    %v646 = vpack.c.b16 %v621, %v620
    %v647 = vpack.c.b16 %v623, %v622
    %v648 = vpack.c.b16 %v625, %v624
    %v649 = vpack.c.b16 %v627, %v626
    %v650 = vpack.c.b16 %v629, %v628
    %v651 = vpack.c.b16 %v631, %v630
    %v652 = vpack.c.b16 %v633, %v632
    %v653 = vpack.c.b16 %v635, %v634
    %v654 = vpack.c.b16 %v637, %v636
    %v655 = vpack.c.b16 %v639, %v638
    %672 = vmatprep.subr.bf16.mxu0 0
    %673 = vmatpush1.bf16.msra.mxu0 %v647
    %674 = vmatprep.subr.bf16.mxu0 0
    %675 = vmatpush1.bf16.msra.mxu0 %v646
    %676 = vmatprep.subr.bf16.mxu0 0
    %677 = vmatpush1.bf16.msra.mxu0 %v645
    %678 = vmatprep.subr.bf16.mxu0 0
    %679 = vmatpush1.bf16.msra.mxu0 %v644
    %680 = vmatprep.subr.bf16.mxu0 0
    %681 = vmatpush1.bf16.msra.mxu0 %v643
    %682 = vmatprep.subr.bf16.mxu0 0
    %683 = vmatpush1.bf16.msra.mxu0 %v642
    %684 = vmatprep.subr.bf16.mxu0 0
    %685 = vmatpush1.bf16.msra.mxu0 %v641
    %686 = vmatprep.subr.bf16.mxu0 0
    %687 = vmatpush1.bf16.msra.mxu0 %v640
    %688 = vmatprep.subr.bf16.mxu0 0
    %689 = vmatpush2.bf16.msra.mxu0 %v655
    %690 = vmatprep.subr.bf16.mxu0 0
    %691 = vmatpush2.bf16.msra.mxu0 %v654
    %692 = vmatprep.subr.bf16.mxu0 0
    %693 = vmatpush2.bf16.msra.mxu0 %v653
    %694 = vmatprep.subr.bf16.mxu0 0
    %695 = vmatpush2.bf16.msra.mxu0 %v652
    %696 = vmatprep.subr.bf16.mxu0 0
    %697 = vmatpush2.bf16.msra.mxu0 %v651
    %698 = vmatprep.subr.bf16.mxu0 0
    %699 = vmatpush2.bf16.msra.mxu0 %v650
    %700 = vmatprep.subr.bf16.mxu0 0
    %701 = vmatpush2.bf16.msra.mxu0 %v649
    %702 = vmatprep.subr.bf16.mxu0 0
    %703 = vmatpush2.bf16.msra.mxu0 %v648
    %704 = vmatprep.mubr.bf16.mxu0 %v569
    %705 = vmatmul.mubr.bf16.gmra.mxu0 %v568
    %v706 = vpop.f32.mrf.mxu0
    %v707 = vadd.f32 %v574, %v706
    %v708 = vpop.f32.mrf.mxu0
    %v709 = vpop.f32.mrf.mxu0
    %v710 = vadd.f32 %v574, %v709
    %v711 = vpop.f32.mrf.mxu0
    %712 = vdwg.mxu0
    %v713 = vld [vmem:[#allocation6] sm:$0xf]
    %v714 = vld [vmem:[#allocation6 + $0x4] sm:$0xf]
    %v715 = vld [vmem:[#allocation6 + $0x8] sm:$0xf]
    %v716 = vld [vmem:[#allocation6 + $0xc] sm:$0xf]
    %v717 = vld [vmem:[#allocation6 + $0x10] sm:$0xf]
    %v718 = vld [vmem:[#allocation6 + $0x14] sm:$0xf]
    %v719 = vld [vmem:[#allocation6 + $0x18] sm:$0xf]
    %v720 = vld [vmem:[#allocation6 + $0x1c] sm:$0xf]
    %v721 = vld [vmem:[#allocation6 + $0x20] sm:$0xf]
    %v722 = vld [vmem:[#allocation6 + $0x24] sm:$0xf]
    %v723 = vld [vmem:[#allocation6 + $0x28] sm:$0xf]
    %v724 = vld [vmem:[#allocation6 + $0x2c] sm:$0xf]
    %v725 = vld [vmem:[#allocation6 + $0x30] sm:$0xf]
    %v726 = vld [vmem:[#allocation6 + $0x34] sm:$0xf]
    %v727 = vld [vmem:[#allocation6 + $0x38] sm:$0xf]
    %v728 = vld [vmem:[#allocation6 + $0x3c] sm:$0xf]
    %v729 = vld [vmem:[%s9] sm:$0x1]
    %v730 = vpack.c.bf16 %v710, %v707
    %v732 = vlaneseq
    %v733 = vshrl.u32 %v732, 7
    %v734 = vsub.s32 0, %v733
    %v735 = vrot.slane %v729, %v734
    %v753 = vunpack.c.l.b16 %v713
    %v754 = vunpack.c.l.b16 %v714
    %v755 = vunpack.c.l.b16 %v715
    %v756 = vunpack.c.l.b16 %v716
    %v757 = vunpack.c.l.b16 %v717
    %v758 = vunpack.c.l.b16 %v718
    %v759 = vunpack.c.l.b16 %v719
    %v760 = vunpack.c.l.b16 %v720
    %v761 = vunpack.c.l.b16 %v721
    %v762 = vunpack.c.l.b16 %v722
    %v763 = vunpack.c.l.b16 %v723
    %v764 = vunpack.c.l.b16 %v724
    %v765 = vunpack.c.l.b16 %v725
    %v766 = vunpack.c.l.b16 %v726
    %v767 = vunpack.c.l.b16 %v727
    %v768 = vunpack.c.l.b16 %v728
    %v769 = vpack.c.b16 %v754, %v753
    %v770 = vpack.c.b16 %v756, %v755
    %v771 = vpack.c.b16 %v758, %v757
    %v772 = vpack.c.b16 %v760, %v759
    %v773 = vpack.c.b16 %v762, %v761
    %v774 = vpack.c.b16 %v764, %v763
    %v775 = vpack.c.b16 %v766, %v765
    %v776 = vpack.c.b16 %v768, %v767
    %785 = vmatprep.subr.bf16.mxu0 0
    %786 = vmatpush1.bf16.msra.mxu0 %v776
    %787 = vmatprep.subr.bf16.mxu0 0
    %788 = vmatpush1.bf16.msra.mxu0 %v775
    %789 = vmatprep.subr.bf16.mxu0 0
    %790 = vmatpush1.bf16.msra.mxu0 %v774
    %791 = vmatprep.subr.bf16.mxu0 0
    %792 = vmatpush1.bf16.msra.mxu0 %v773
    %793 = vmatprep.subr.bf16.mxu0 0
    %794 = vmatpush1.bf16.msra.mxu0 %v772
    %795 = vmatprep.subr.bf16.mxu0 0
    %796 = vmatpush1.bf16.msra.mxu0 %v771
    %797 = vmatprep.subr.bf16.mxu0 0
    %798 = vmatpush1.bf16.msra.mxu0 %v770
    %799 = vmatprep.subr.bf16.mxu0 0
    %800 = vmatpush1.bf16.msra.mxu0 %v769
    %801 = vmatprep.subr.bf16.mxu0 0
    %802 = vmatpush2.bf16.msra.mxu0 0
    %803 = vmatprep.subr.bf16.mxu0 0
    %804 = vmatpush2.bf16.msra.mxu0 0
    %805 = vmatprep.subr.bf16.mxu0 0
    %806 = vmatpush2.bf16.msra.mxu0 0
    %807 = vmatprep.subr.bf16.mxu0 0
    %808 = vmatpush2.bf16.msra.mxu0 0
    %809 = vmatprep.subr.bf16.mxu0 0
    %810 = vmatpush2.bf16.msra.mxu0 0
    %811 = vmatprep.subr.bf16.mxu0 0
    %812 = vmatpush2.bf16.msra.mxu0 0
    %813 = vmatprep.subr.bf16.mxu0 0
    %814 = vmatpush2.bf16.msra.mxu0 0
    %815 = vmatprep.subr.bf16.mxu0 0
    %816 = vmatpush2.bf16.msra.mxu0 0
    %817 = vmatprep.mubr.bf16.mxu0 0
    %818 = vmatmul.mubr.bf16.gmra.mxu0 %v730
    %v819 = vpop.f32.mrf.mxu0
    %v820 = vadd.f32 %v735, %v819
    %v821 = vpop.f32.mrf.mxu0
    %v822 = vpop.f32.mrf.mxu0
    %v823 = vadd.f32 %v735, %v822
    %v824 = vpop.f32.mrf.mxu0
    %825 = vdwg.mxu0
    %v826 = vadd.f32 %v263, %v820
    %v827 = vadd.f32 %v266, %v823
    %828 = vst [vmem:[%s10] sm:$0xff] %v826
    %829 = vst [vmem:[%s10 + $0x8] sm:$0xff] %v827
    // Predicated region
    $region54: #{_lambda_.1} parent=1 // pred_check
      _
    $region55: #{_lambda_.1} parent=1 // pred_check_branch
      %831 = sbr.rel (0) target = $region57
    $region56: #{_lambda_.1} parent=1 // pred_region
      _
    $region57: #{_lambda_.1} parent=1 // pred_fallthru
      _
    // Predicated region
    $region58: #{_lambda_.1} parent=1 // pred_check
      _
    $region59: #{_lambda_.1} parent=1 // pred_check_branch
      %833 = sbr.rel (0) target = $region61
    $region60: #{_lambda_.1} parent=1 // pred_region
      _
    $region61: #{_lambda_.1} parent=1 // pred_fallthru
      _
    %834 = vsyncpa [#allocation3], 1
    %835 = vsyncpa [#allocation5], 1

</llo_original>
